<compile_context>
chip_gen: v7x
topology: tpu7x:2x2x1
jax: 0.10.0
libtpu: 0.0.40
codegen_flags: <defaults>
</compile_context>

<pallas_src>
import jax
import jax.numpy as jnp
from jax.experimental import pallas as pl
from jax.experimental.pallas import tpu as pltpu


def gru_seq_kernel(x_ref, h0_ref, wih_ref, whh_ref, b_ref,
                   out_ref, h_final_ref):
    """Full GRU recurrence over all T steps in one kernel invocation.

    x_ref   : (T, K, H) f32
    h0_ref  : (K, H)    f32
    wih_ref : (H, 3H)   f32   -- W_ih^T, gate blocks [r | z | n] along lanes
    whh_ref : (H, 3H)   f32   -- W_hh^T, gate blocks [r | z | n] along lanes
    b_ref   : (1, 4H)   f32   -- [ b_ir+b_hr | b_iz+b_hz | b_in | b_hn ]
    out_ref : (T, K, H) f32
    h_final_ref : (K, H) f32
    """
    T, K, H = x_ref.shape

    # --- Hoisted work (runs once, outside the time loop) -------------------
    # Input-path gates for ALL timesteps in a single MXU matmul, with the
    # r/z/n input-side biases (and the hidden-side r/z biases) pre-folded in.
    x_all = x_ref[...].reshape(T * K, H)                       # (T*K, H)
    gi_all = jnp.dot(x_all, wih_ref[...],
                     preferred_element_type=jnp.float32)       # (T*K, 3H)
    gi_all = gi_all + b_ref[0:1, 0:3 * H]                      # broadcast once
    gi_all = gi_all.reshape(T, K, 3 * H)

    b_hn = jnp.broadcast_to(b_ref[0:1, 3 * H:4 * H], (K, H))   # hoisted bcast
    whh = whh_ref[...]                                         # hoisted load

    # --- Recurrence (fully unrolled; T is static and small) ----------------
    h = h0_ref[...]                                            # (K, H) f32
    for t in range(T):
        gi = gi_all[t]                                         # (K, 3H)
        gh = jnp.dot(h, whh,
                     preferred_element_type=jnp.float32)       # (K, 3H)

        # r and z with a single EUP sigmoid over the first 2H lanes.
        rz = jax.nn.sigmoid(gi[:, 0:2 * H] + gh[:, 0:2 * H])   # (K, 2H)
        r = rz[:, 0:H]
        z = rz[:, H:2 * H]
        n = jnp.tanh(gi[:, 2 * H:3 * H] + r * (gh[:, 2 * H:3 * H] + b_hn))
        h = (1.0 - z) * n + z * h

        out_ref[t] = h                                         # (K, H) store

    h_final_ref[...] = h                                       # written once


def path_decoder_forward(x, h0, w_ih, w_hh, b_ih, b_hh):
    """PathDecoder.forward.

    x    : (T, K, H) float32   -- GRU input (seq-first, like nn.GRU default)
    h0   : (1, K, H) float32   -- self.hidden (initHidden)
    w_ih : (3H, H), w_hh : (3H, H), b_ih/b_hh : (3H,)  -- PyTorch GRU params.

    Returns (output, hidden_new):
        output     : (T, K, H)   (what PathDecoder.forward returns)
        hidden_new : (1, K, H)   (the updated self.hidden)
    """
    T, K, H = x.shape

    # Pack weights: PyTorch (3H, H) row-blocks [r;z;n] -> (H, 3H) lane-blocks.
    wih_packed = jnp.transpose(w_ih).astype(jnp.float32)        # (H, 3H)
    whh_packed = jnp.transpose(w_hh).astype(jnp.float32)        # (H, 3H)

    # Pre-fold biases: r/z lanes get (b_ih + b_hh); n lanes keep b_in and b_hn
    # separate because of the r * (h W_hn + b_hn) term.  Packed as (1, 4H).
    b_rz = b_ih[0:2 * H] + b_hh[0:2 * H]                        # (2H,)
    b_in = b_ih[2 * H:3 * H]                                    # (H,)
    b_hn = b_hh[2 * H:3 * H]                                    # (H,)
    b_packed = jnp.concatenate([b_rz, b_in, b_hn])[None, :].astype(jnp.float32)

    h0_2d = h0[0].astype(jnp.float32)                           # (K, H)

    vmem_spec = pl.BlockSpec(memory_space=pltpu.MemorySpace.VMEM)

    out, h_final = pl.pallas_call(
        gru_seq_kernel,
        out_shape=(
            jax.ShapeDtypeStruct((T, K, H), jnp.float32),
            jax.ShapeDtypeStruct((K, H), jnp.float32),
        ),
        in_specs=[vmem_spec] * 5,          # whole arrays resident in VMEM
        out_specs=(vmem_spec, vmem_spec),
    )(x.astype(jnp.float32), h0_2d, wih_packed, whh_packed, b_packed)

    return out, h_final[None, :, :]


def _reference(x, h0, w_ih, w_hh, b_ih, b_hh):
    """Pure-jnp GRU matching torch.nn.GRU(num_layers=1) semantics."""
    H = h0.shape[-1]
    wih_t = jnp.transpose(w_ih)
    whh_t = jnp.transpose(w_hh)

    def step(h, x_t):
        gi = x_t @ wih_t + b_ih
        gh = h @ whh_t + b_hh
        r = jax.nn.sigmoid(gi[:, 0:H] + gh[:, 0:H])
        z = jax.nn.sigmoid(gi[:, H:2 * H] + gh[:, H:2 * H])
        n = jnp.tanh(gi[:, 2 * H:3 * H] + r * gh[:, 2 * H:3 * H])
        h_new = (1.0 - z) * n + z * h
        return h_new, h_new

    h_last, ys = jax.lax.scan(step, h0[0], x)
    return ys, h_last[None, :, :]


if __name__ == "__main__":
    # Small, deterministic configuration consistent with PathDecoder.__init__:
    #   args.path_hidden_size = 32, args.k = 8 (beam width), args.hops = 4.
    hidden_size = 32
    k = 8
    hops = 4

    key = jax.random.PRNGKey(0)
    k_x, k_wih, k_whh, k_bih, k_bhh = jax.random.split(key, 5)

    x = jax.random.normal(k_x, (hops, k, hidden_size), dtype=jnp.float32)
    # self.hidden = initHidden(args): zeros of shape (1, k, hidden_size).
    h0 = jnp.zeros((1, k, hidden_size), dtype=jnp.float32)

    # PyTorch GRU parameter layouts: weight_{ih,hh}_l0 (3H, H), bias (3H,).
    scale = 1.0 / jnp.sqrt(hidden_size)
    w_ih = jax.random.uniform(k_wih, (3 * hidden_size, hidden_size),
                              minval=-scale, maxval=scale, dtype=jnp.float32)
    w_hh = jax.random.uniform(k_whh, (3 * hidden_size, hidden_size),
                              minval=-scale, maxval=scale, dtype=jnp.float32)
    b_ih = jax.random.uniform(k_bih, (3 * hidden_size,),
                              minval=-scale, maxval=scale, dtype=jnp.float32)
    b_hh = jax.random.uniform(k_bhh, (3 * hidden_size,),
                              minval=-scale, maxval=scale, dtype=jnp.float32)

    fwd = jax.jit(path_decoder_forward)
    out, h_new = fwd(x, h0, w_ih, w_hh, b_ih, b_hh)
    out = jax.block_until_ready(out)
    h_new = jax.block_until_ready(h_new)

    ref_out, ref_h = _reference(x, h0, w_ih, w_hh, b_ih, b_hh)

    assert out.shape == (hops, k, hidden_size), out.shape
    assert h_new.shape == (1, k, hidden_size), h_new.shape
    assert jnp.allclose(out, ref_out, atol=1e-4, rtol=1e-4), (
        jnp.max(jnp.abs(out - ref_out)))
    assert jnp.allclose(h_new, ref_h, atol=1e-4, rtol=1e-4), (
        jnp.max(jnp.abs(h_new - ref_h)))

    print("KERNEL_OK")
</pallas_src>

<mosaic_0001>
module attributes {stable_mosaic.version = 11 : i64} {
  func.func @gru_seq_kernel(%arg0: memref<4x8x32xf32, #tpu.memory_space<vmem>>, %arg1: memref<8x32xf32, #tpu.memory_space<vmem>>, %arg2: memref<32x96xf32, #tpu.memory_space<vmem>>, %arg3: memref<32x96xf32, #tpu.memory_space<vmem>>, %arg4: memref<1x128xf32, #tpu.memory_space<vmem>>, %arg5: memref<4x8x32xf32, #tpu.memory_space<vmem>>, %arg6: memref<8x32xf32, #tpu.memory_space<vmem>>) attributes {dimension_semantics = [], scalar_prefetch = 0 : i64, scratch_operands = 0 : i64, tpu.core_type = #tpu.core_type<tc>} {
    %c0 = arith.constant 0 : index
    %c0_0 = arith.constant 0 : index
    %c0_1 = arith.constant 0 : index
    %0 = vector.load %arg0[%c0, %c0_0, %c0_1] : memref<4x8x32xf32, #tpu.memory_space<vmem>>, vector<4x8x32xf32>
    %1 = vector.shape_cast %0 : vector<4x8x32xf32> to vector<32x32xf32>
    %c0_2 = arith.constant 0 : index
    %c0_3 = arith.constant 0 : index
    %2 = vector.load %arg2[%c0_2, %c0_3] : memref<32x96xf32, #tpu.memory_space<vmem>>, vector<32x96xf32>
    %cst = arith.constant dense<0.000000e+00> : vector<32x96xf32>
    %3 = tpu.matmul %1, %2, %cst {dimension_numbers = #tpu.dot_dimension_numbers<[1], [0], [0], [1], [0, 0, 1, 1], [], []>} : vector<32x32xf32>, vector<32x96xf32>, vector<32x96xf32> -> vector<32x96xf32>
    %c0_4 = arith.constant 0 : index
    %c0_5 = arith.constant 0 : index
    %4 = vector.load %arg4[%c0_4, %c0_5] : memref<1x128xf32, #tpu.memory_space<vmem>>, vector<1x96xf32>
    %5 = vector.broadcast %4 : vector<1x96xf32> to vector<32x96xf32>
    %6 = arith.addf %3, %5 : vector<32x96xf32>
    %7 = vector.shape_cast %6 : vector<32x96xf32> to vector<4x8x96xf32>
    %c0_6 = arith.constant 0 : index
    %c96 = arith.constant 96 : index
    %8 = vector.load %arg4[%c0_6, %c96] : memref<1x128xf32, #tpu.memory_space<vmem>>, vector<1x32xf32>
    %9 = vector.shape_cast %8 : vector<1x32xf32> to vector<1x32xf32>
    %10 = vector.broadcast %9 : vector<1x32xf32> to vector<8x32xf32>
    %c0_7 = arith.constant 0 : index
    %c0_8 = arith.constant 0 : index
    %11 = vector.load %arg3[%c0_7, %c0_8] : memref<32x96xf32, #tpu.memory_space<vmem>>, vector<32x96xf32>
    %c0_9 = arith.constant 0 : index
    %c0_10 = arith.constant 0 : index
    %12 = vector.load %arg1[%c0_9, %c0_10] : memref<8x32xf32, #tpu.memory_space<vmem>>, vector<8x32xf32>
    %13 = vector.extract_strided_slice %7 {offsets = [0, 0, 0], sizes = [1, 8, 96], strides = [1, 1, 1]} : vector<4x8x96xf32> to vector<1x8x96xf32>
    %14 = vector.shape_cast %13 : vector<1x8x96xf32> to vector<8x96xf32>
    %cst_11 = arith.constant dense<0.000000e+00> : vector<8x96xf32>
    %15 = tpu.matmul %12, %11, %cst_11 {dimension_numbers = #tpu.dot_dimension_numbers<[1], [0], [0], [1], [0, 0, 1, 1], [], []>} : vector<8x32xf32>, vector<32x96xf32>, vector<8x96xf32> -> vector<8x96xf32>
    %16 = vector.extract_strided_slice %14 {offsets = [0, 0], sizes = [8, 64], strides = [1, 1]} : vector<8x96xf32> to vector<8x64xf32>
    %17 = vector.extract_strided_slice %15 {offsets = [0, 0], sizes = [8, 64], strides = [1, 1]} : vector<8x96xf32> to vector<8x64xf32>
    %18 = arith.addf %16, %17 : vector<8x64xf32>
    %19 = arith.negf %18 : vector<8x64xf32>
    %20 = math.exp %19 : vector<8x64xf32>
    %cst_12 = arith.constant 1.000000e+00 : f32
    %21 = vector.broadcast %cst_12 : f32 to vector<8x64xf32>
    %22 = arith.addf %21, %20 : vector<8x64xf32>
    %23 = arith.divf %21, %22 : vector<8x64xf32>
    %24 = vector.extract_strided_slice %23 {offsets = [0, 0], sizes = [8, 32], strides = [1, 1]} : vector<8x64xf32> to vector<8x32xf32>
    %25 = vector.extract_strided_slice %23 {offsets = [0, 32], sizes = [8, 32], strides = [1, 1]} : vector<8x64xf32> to vector<8x32xf32>
    %26 = vector.extract_strided_slice %14 {offsets = [0, 64], sizes = [8, 32], strides = [1, 1]} : vector<8x96xf32> to vector<8x32xf32>
    %27 = vector.extract_strided_slice %15 {offsets = [0, 64], sizes = [8, 32], strides = [1, 1]} : vector<8x96xf32> to vector<8x32xf32>
    %28 = arith.addf %27, %10 : vector<8x32xf32>
    %29 = arith.mulf %24, %28 : vector<8x32xf32>
    %30 = arith.addf %26, %29 : vector<8x32xf32>
    %31 = math.tanh %30 : vector<8x32xf32>
    %cst_13 = arith.constant 1.000000e+00 : f32
    %32 = vector.broadcast %cst_13 : f32 to vector<8x32xf32>
    %33 = arith.subf %32, %25 : vector<8x32xf32>
    %34 = arith.mulf %33, %31 : vector<8x32xf32>
    %35 = arith.mulf %25, %12 : vector<8x32xf32>
    %36 = arith.addf %34, %35 : vector<8x32xf32>
    %c0_14 = arith.constant 0 : index
    %c0_15 = arith.constant 0 : index
    %c0_16 = arith.constant 0 : index
    %37 = vector.load %arg5[%c0_14, %c0_15, %c0_16] : memref<4x8x32xf32, #tpu.memory_space<vmem>>, vector<1x8x32xf32>
    %38 = vector.shape_cast %37 : vector<1x8x32xf32> to vector<8x32xf32>
    %39 = vector.shape_cast %36 : vector<8x32xf32> to vector<1x8x32xf32>
    tpu.vector_store %arg5[%c0_14, %c0_15, %c0_16], %39 {strides = array<i32>} : memref<4x8x32xf32, #tpu.memory_space<vmem>>, vector<1x8x32xf32>,
    %40 = vector.extract_strided_slice %7 {offsets = [1, 0, 0], sizes = [1, 8, 96], strides = [1, 1, 1]} : vector<4x8x96xf32> to vector<1x8x96xf32>
    %41 = vector.shape_cast %40 : vector<1x8x96xf32> to vector<8x96xf32>
    %cst_17 = arith.constant dense<0.000000e+00> : vector<8x96xf32>
    %42 = tpu.matmul %36, %11, %cst_17 {dimension_numbers = #tpu.dot_dimension_numbers<[1], [0], [0], [1], [0, 0, 1, 1], [], []>} : vector<8x32xf32>, vector<32x96xf32>, vector<8x96xf32> -> vector<8x96xf32>
    %43 = vector.extract_strided_slice %41 {offsets = [0, 0], sizes = [8, 64], strides = [1, 1]} : vector<8x96xf32> to vector<8x64xf32>
    %44 = vector.extract_strided_slice %42 {offsets = [0, 0], sizes = [8, 64], strides = [1, 1]} : vector<8x96xf32> to vector<8x64xf32>
    %45 = arith.addf %43, %44 : vector<8x64xf32>
    %46 = arith.negf %45 : vector<8x64xf32>
    %47 = math.exp %46 : vector<8x64xf32>
    %cst_18 = arith.constant 1.000000e+00 : f32
    %48 = vector.broadcast %cst_18 : f32 to vector<8x64xf32>
    %49 = arith.addf %48, %47 : vector<8x64xf32>
    %50 = arith.divf %48, %49 : vector<8x64xf32>
    %51 = vector.extract_strided_slice %50 {offsets = [0, 0], sizes = [8, 32], strides = [1, 1]} : vector<8x64xf32> to vector<8x32xf32>
    %52 = vector.extract_strided_slice %50 {offsets = [0, 32], sizes = [8, 32], strides = [1, 1]} : vector<8x64xf32> to vector<8x32xf32>
    %53 = vector.extract_strided_slice %41 {offsets = [0, 64], sizes = [8, 32], strides = [1, 1]} : vector<8x96xf32> to vector<8x32xf32>
    %54 = vector.extract_strided_slice %42 {offsets = [0, 64], sizes = [8, 32], strides = [1, 1]} : vector<8x96xf32> to vector<8x32xf32>
    %55 = arith.addf %54, %10 : vector<8x32xf32>
    %56 = arith.mulf %51, %55 : vector<8x32xf32>
    %57 = arith.addf %53, %56 : vector<8x32xf32>
    %58 = math.tanh %57 : vector<8x32xf32>
    %cst_19 = arith.constant 1.000000e+00 : f32
    %59 = vector.broadcast %cst_19 : f32 to vector<8x32xf32>
    %60 = arith.subf %59, %52 : vector<8x32xf32>
    %61 = arith.mulf %60, %58 : vector<8x32xf32>
    %62 = arith.mulf %52, %36 : vector<8x32xf32>
    %63 = arith.addf %61, %62 : vector<8x32xf32>
    %c1 = arith.constant 1 : index
    %c0_20 = arith.constant 0 : index
    %c0_21 = arith.constant 0 : index
    %64 = vector.load %arg5[%c1, %c0_20, %c0_21] : memref<4x8x32xf32, #tpu.memory_space<vmem>>, vector<1x8x32xf32>
    %65 = vector.shape_cast %64 : vector<1x8x32xf32> to vector<8x32xf32>
    %66 = vector.shape_cast %63 : vector<8x32xf32> to vector<1x8x32xf32>
    tpu.vector_store %arg5[%c1, %c0_20, %c0_21], %66 {strides = array<i32>} : memref<4x8x32xf32, #tpu.memory_space<vmem>>, vector<1x8x32xf32>,
    %67 = vector.extract_strided_slice %7 {offsets = [2, 0, 0], sizes = [1, 8, 96], strides = [1, 1, 1]} : vector<4x8x96xf32> to vector<1x8x96xf32>
    %68 = vector.shape_cast %67 : vector<1x8x96xf32> to vector<8x96xf32>
    %cst_22 = arith.constant dense<0.000000e+00> : vector<8x96xf32>
    %69 = tpu.matmul %63, %11, %cst_22 {dimension_numbers = #tpu.dot_dimension_numbers<[1], [0], [0], [1], [0, 0, 1, 1], [], []>} : vector<8x32xf32>, vector<32x96xf32>, vector<8x96xf32> -> vector<8x96xf32>
    %70 = vector.extract_strided_slice %68 {offsets = [0, 0], sizes = [8, 64], strides = [1, 1]} : vector<8x96xf32> to vector<8x64xf32>
    %71 = vector.extract_strided_slice %69 {offsets = [0, 0], sizes = [8, 64], strides = [1, 1]} : vector<8x96xf32> to vector<8x64xf32>
    %72 = arith.addf %70, %71 : vector<8x64xf32>
    %73 = arith.negf %72 : vector<8x64xf32>
    %74 = math.exp %73 : vector<8x64xf32>
    %cst_23 = arith.constant 1.000000e+00 : f32
    %75 = vector.broadcast %cst_23 : f32 to vector<8x64xf32>
    %76 = arith.addf %75, %74 : vector<8x64xf32>
    %77 = arith.divf %75, %76 : vector<8x64xf32>
    %78 = vector.extract_strided_slice %77 {offsets = [0, 0], sizes = [8, 32], strides = [1, 1]} : vector<8x64xf32> to vector<8x32xf32>
    %79 = vector.extract_strided_slice %77 {offsets = [0, 32], sizes = [8, 32], strides = [1, 1]} : vector<8x64xf32> to vector<8x32xf32>
    %80 = vector.extract_strided_slice %68 {offsets = [0, 64], sizes = [8, 32], strides = [1, 1]} : vector<8x96xf32> to vector<8x32xf32>
    %81 = vector.extract_strided_slice %69 {offsets = [0, 64], sizes = [8, 32], strides = [1, 1]} : vector<8x96xf32> to vector<8x32xf32>
    %82 = arith.addf %81, %10 : vector<8x32xf32>
    %83 = arith.mulf %78, %82 : vector<8x32xf32>
    %84 = arith.addf %80, %83 : vector<8x32xf32>
    %85 = math.tanh %84 : vector<8x32xf32>
    %cst_24 = arith.constant 1.000000e+00 : f32
    %86 = vector.broadcast %cst_24 : f32 to vector<8x32xf32>
    %87 = arith.subf %86, %79 : vector<8x32xf32>
    %88 = arith.mulf %87, %85 : vector<8x32xf32>
    %89 = arith.mulf %79, %63 : vector<8x32xf32>
    %90 = arith.addf %88, %89 : vector<8x32xf32>
    %c2 = arith.constant 2 : index
    %c0_25 = arith.constant 0 : index
    %c0_26 = arith.constant 0 : index
    %91 = vector.load %arg5[%c2, %c0_25, %c0_26] : memref<4x8x32xf32, #tpu.memory_space<vmem>>, vector<1x8x32xf32>
    %92 = vector.shape_cast %91 : vector<1x8x32xf32> to vector<8x32xf32>
    %93 = vector.shape_cast %90 : vector<8x32xf32> to vector<1x8x32xf32>
    tpu.vector_store %arg5[%c2, %c0_25, %c0_26], %93 {strides = array<i32>} : memref<4x8x32xf32, #tpu.memory_space<vmem>>, vector<1x8x32xf32>,
    %94 = vector.extract_strided_slice %7 {offsets = [3, 0, 0], sizes = [1, 8, 96], strides = [1, 1, 1]} : vector<4x8x96xf32> to vector<1x8x96xf32>
    %95 = vector.shape_cast %94 : vector<1x8x96xf32> to vector<8x96xf32>
    %cst_27 = arith.constant dense<0.000000e+00> : vector<8x96xf32>
    %96 = tpu.matmul %90, %11, %cst_27 {dimension_numbers = #tpu.dot_dimension_numbers<[1], [0], [0], [1], [0, 0, 1, 1], [], []>} : vector<8x32xf32>, vector<32x96xf32>, vector<8x96xf32> -> vector<8x96xf32>
    %97 = vector.extract_strided_slice %95 {offsets = [0, 0], sizes = [8, 64], strides = [1, 1]} : vector<8x96xf32> to vector<8x64xf32>
    %98 = vector.extract_strided_slice %96 {offsets = [0, 0], sizes = [8, 64], strides = [1, 1]} : vector<8x96xf32> to vector<8x64xf32>
    %99 = arith.addf %97, %98 : vector<8x64xf32>
    %100 = arith.negf %99 : vector<8x64xf32>
    %101 = math.exp %100 : vector<8x64xf32>
    %cst_28 = arith.constant 1.000000e+00 : f32
    %102 = vector.broadcast %cst_28 : f32 to vector<8x64xf32>
    %103 = arith.addf %102, %101 : vector<8x64xf32>
    %104 = arith.divf %102, %103 : vector<8x64xf32>
    %105 = vector.extract_strided_slice %104 {offsets = [0, 0], sizes = [8, 32], strides = [1, 1]} : vector<8x64xf32> to vector<8x32xf32>
    %106 = vector.extract_strided_slice %104 {offsets = [0, 32], sizes = [8, 32], strides = [1, 1]} : vector<8x64xf32> to vector<8x32xf32>
    %107 = vector.extract_strided_slice %95 {offsets = [0, 64], sizes = [8, 32], strides = [1, 1]} : vector<8x96xf32> to vector<8x32xf32>
    %108 = vector.extract_strided_slice %96 {offsets = [0, 64], sizes = [8, 32], strides = [1, 1]} : vector<8x96xf32> to vector<8x32xf32>
    %109 = arith.addf %108, %10 : vector<8x32xf32>
    %110 = arith.mulf %105, %109 : vector<8x32xf32>
    %111 = arith.addf %107, %110 : vector<8x32xf32>
    %112 = math.tanh %111 : vector<8x32xf32>
    %cst_29 = arith.constant 1.000000e+00 : f32
    %113 = vector.broadcast %cst_29 : f32 to vector<8x32xf32>
    %114 = arith.subf %113, %106 : vector<8x32xf32>
    %115 = arith.mulf %114, %112 : vector<8x32xf32>
    %116 = arith.mulf %106, %90 : vector<8x32xf32>
    %117 = arith.addf %115, %116 : vector<8x32xf32>
    %c3 = arith.constant 3 : index
    %c0_30 = arith.constant 0 : index
    %c0_31 = arith.constant 0 : index
    %118 = vector.load %arg5[%c3, %c0_30, %c0_31] : memref<4x8x32xf32, #tpu.memory_space<vmem>>, vector<1x8x32xf32>
    %119 = vector.shape_cast %118 : vector<1x8x32xf32> to vector<8x32xf32>
    %120 = vector.shape_cast %117 : vector<8x32xf32> to vector<1x8x32xf32>
    tpu.vector_store %arg5[%c3, %c0_30, %c0_31], %120 {strides = array<i32>} : memref<4x8x32xf32, #tpu.memory_space<vmem>>, vector<1x8x32xf32>,
    %c0_32 = arith.constant 0 : index
    %c0_33 = arith.constant 0 : index
    %121 = vector.load %arg6[%c0_32, %c0_33] : memref<8x32xf32, #tpu.memory_space<vmem>>, vector<8x32xf32>
    tpu.vector_store %arg6[%c0_32, %c0_33], %117 {strides = array<i32>} : memref<8x32xf32, #tpu.memory_space<vmem>>, vector<8x32xf32>,
    return
  }
}

</mosaic_0001>

<llo_original>
// kernel: path_decoder_forward.1
$region0: #{path_decoder_forward.1}
  #allocation0 [shape = 'u32[]', space=smem, size = 0x4, offset = 0x4, fixed_abs, tag = 'smem constant byte address 0x4 - core index']
  #allocation1 [shape = 'u32[144,128]{1,0:T(1,128)}', space=vmem, size = 0x12000, scoped, tag = 'internal scratch']
  %s0 = inlined_call_operand.hbm [shape: f32[4,8,32], index: 0, kind: input, shape index: {}]
  %s1 = inlined_call_operand.hbm [shape: f32[8,32], index: 1, kind: input, shape index: {}]
  %s2 = inlined_call_operand.vmem [shape: f32[32,96], index: 2, kind: input, shape index: {}]
  %s3 = inlined_call_operand.hbm [shape: f32[32,96], index: 3, kind: input, shape index: {}]
  %s4 = inlined_call_operand.vmem [shape: f32[1,128], index: 4, kind: input, shape index: {}]
  %s5 = inlined_call_operand.hbm [shape: f32[4,8,32], index: 5, kind: output, shape index: {0}]
  %s6 = inlined_call_operand.hbm [shape: f32[8,32], index: 6, kind: output, shape index: {1}]
  %7 = xla_tuple %s5, %s6
  %s8 = sld [smem:[#allocation0]]
  $region50: #{path_decoder_forward.1} parent=0
    _
  %s10 = ssub.s32 1, %s8
  %s11 = scalar_select 0, %s10, %s8
  $region1: #{path_decoder_forward.1} parent=0
    #allocation2 [shape = 'u8[16384]{0}', space=vmem, size = 0x4000, scoped, tag = 'input window, operand 0, single buffered']
    #allocation3 [shape = 's32[1]{0}', space=sflag, size = 0x4, scoped, tag = 'scoped memory for path_decoder_forward.1']
    #allocation4 [shape = 's32[1]{0}', space=sflag, size = 0x4, scoped, tag = 'scoped memory for path_decoder_forward.1']
    #allocation5 [shape = 'u8[4096]{0}', space=vmem, size = 0x1000, scoped, tag = 'input window, operand 1, single buffered']
    #allocation6 [shape = 's32[1]{0}', space=sflag, size = 0x4, scoped, tag = 'scoped memory for path_decoder_forward.1']
    #allocation7 [shape = 'u8[16384]{0}', space=vmem, size = 0x4000, scoped, tag = 'input window, operand 3, single buffered']
    #allocation8 [shape = 'u8[16384]{0}', space=vmem, size = 0x4000, scoped, tag = 'output window, operand 0, single buffered']
    #allocation9 [shape = 'u8[4096]{0}', space=vmem, size = 0x1000, scoped, tag = 'output window, operand 1, single buffered']
    #allocation10 [shape = 's32[1]{0}', space=sflag, size = 0x4, scoped, tag = 'scoped memory for path_decoder_forward.1']
    %12 = vsyncpa [#allocation3], 0
    %13 = vsyncpa [#allocation6], 0
    %14 = vsyncpa [#allocation4], 0
    %15 = vsyncpa [#allocation10], 0
    // Predicated region
    $region2: #{path_decoder_forward.1} parent=1 // pred_check
      _
    $region3: #{path_decoder_forward.1} parent=1 // pred_check_branch
      %17 = sbr.rel (0) target = $region5
    $region4: #{path_decoder_forward.1} parent=1 // pred_region
      %s19 = ssub.s32 512, 512
      %20 = vsyncadd [#allocation3], %s19
      %s21 = sshll.u32 [#allocation2], 4
      %s22 = int_to_ptr.vmem [resolvable:$true] %s21
      %27 = dma.hbm_to_vmem [thread:$0]  %s0, 512, %s22, [#allocation3], 128, 128, 8
    $region5: #{path_decoder_forward.1} parent=1 // pred_fallthru
      _
    // Predicated region
    $region6: #{path_decoder_forward.1} parent=1 // pred_check
      _
    $region7: #{path_decoder_forward.1} parent=1 // pred_check_branch
      %29 = sbr.rel (0) target = $region9
    $region8: #{path_decoder_forward.1} parent=1 // pred_region
      %s31 = ssub.s32 128, 128
      %32 = vsyncadd [#allocation6], %s31
      %s34 = sshll.u32 [#allocation5], 4
      %s35 = int_to_ptr.vmem [resolvable:$true] %s34
      %37 = dma.hbm_to_vmem [thread:$0]  %s1, 128, %s35, [#allocation6]
    $region9: #{path_decoder_forward.1} parent=1 // pred_fallthru
      _
    // Predicated region
    $region10: #{path_decoder_forward.1} parent=1 // pred_check
      _
    $region11: #{path_decoder_forward.1} parent=1 // pred_check_branch
      %39 = sbr.rel (0) target = $region13
    $region12: #{path_decoder_forward.1} parent=1 // pred_region
      _
    $region13: #{path_decoder_forward.1} parent=1 // pred_fallthru
      _
    // Predicated region
    $region14: #{path_decoder_forward.1} parent=1 // pred_check
      _
    $region15: #{path_decoder_forward.1} parent=1 // pred_check_branch
      %41 = sbr.rel (0) target = $region17
    $region16: #{path_decoder_forward.1} parent=1 // pred_region
      %s43 = ssub.s32 512, 512
      %44 = vsyncadd [#allocation6], %s43
      %s45 = sshll.u32 [#allocation7], 4
      %s46 = int_to_ptr.vmem [resolvable:$true] %s45
      %51 = dma.hbm_to_vmem [thread:$0]  %s3, 512, %s46, [#allocation6], 128, 128, 8
    $region17: #{path_decoder_forward.1} parent=1 // pred_fallthru
      _
    // Predicated region
    $region18: #{path_decoder_forward.1} parent=1 // pred_check
      _
    $region19: #{path_decoder_forward.1} parent=1 // pred_check_branch
      %53 = sbr.rel (0) target = $region21
    $region20: #{path_decoder_forward.1} parent=1 // pred_region
      _
    $region21: #{path_decoder_forward.1} parent=1 // pred_fallthru
      _
    // Predicated region
    $region22: #{path_decoder_forward.1} parent=1 // pred_check
      _
    $region23: #{path_decoder_forward.1} parent=1 // pred_check_branch
      %55 = sbr.rel (0) target = $region25
    $region24: #{path_decoder_forward.1} parent=1 // pred_region
      %56 = dma.done [#allocation3], 512
    $region25: #{path_decoder_forward.1} parent=1 // pred_fallthru
      _
    // Predicated region
    $region26: #{path_decoder_forward.1} parent=1 // pred_check
      _
    $region27: #{path_decoder_forward.1} parent=1 // pred_check_branch
      %58 = sbr.rel (0) target = $region29
    $region28: #{path_decoder_forward.1} parent=1 // pred_region
      %59 = dma.done [#allocation6], 128
    $region29: #{path_decoder_forward.1} parent=1 // pred_fallthru
      _
    // Predicated region
    $region30: #{path_decoder_forward.1} parent=1 // pred_check
      _
    $region31: #{path_decoder_forward.1} parent=1 // pred_check_branch
      %61 = sbr.rel (0) target = $region33
    $region32: #{path_decoder_forward.1} parent=1 // pred_region
      %62 = dma.done [#allocation6], 512
    $region33: #{path_decoder_forward.1} parent=1 // pred_fallthru
      _
    %v63 = vld [vmem:[#allocation2] sm:$0xff]
    %v64 = vld [vmem:[#allocation2 + $0x8] sm:$0xff]
    %v65 = vld [vmem:[#allocation2 + $0x10] sm:$0xff]
    %v66 = vld [vmem:[#allocation2 + $0x18] sm:$0xff]
    %v67 = vld [vmem:[%s2] sm:$0xff]
    %v68 = vld [vmem:[%s2 + $0x8] sm:$0xff]
    %v69 = vld [vmem:[%s2 + $0x10] sm:$0xff]
    %v70 = vld [vmem:[%s2 + $0x18] sm:$0xff]
    %v71 = vld [vmem:[%s4] sm:$0x1]
    %v73 = vlaneseq
    %v74 = vshrl.u32 %v73, 7
    %v75 = vsub.s32 0, %v74
    %v76 = vrot.slane %v71, %v75
    %vm78 = vcmask 261120
    %v80 = vsel %vm78, %v63, 0
    %v83 = vsel %vm78, %v64, 0
    %v86 = vsel %vm78, %v65, 0
    %v89 = vsel %vm78, %v66, 0
    %91 = vmatprep.subr.mxu0 0.0
    %92 = vmatpush1.msra.mxu0 %v67
    %93 = vmatprep.subr.mxu0 0.0
    %94 = vmatpush1.msra.mxu0 %v68
    %95 = vmatprep.subr.mxu0 0.0
    %96 = vmatpush1.msra.mxu0 %v69
    %97 = vmatprep.subr.mxu0 0.0
    %98 = vmatpush1.msra.mxu0 %v70
    %99 = vmatprep.subr.mxu0 0.0
    %100 = vmatpush1.msra.mxu0 0.0
    %101 = vmatprep.subr.mxu0 0.0
    %102 = vmatpush1.msra.mxu0 0.0
    %103 = vmatprep.subr.mxu0 0.0
    %104 = vmatpush1.msra.mxu0 0.0
    %105 = vmatprep.subr.mxu0 0.0
    %106 = vmatpush1.msra.mxu0 0.0
    %107 = vmatprep.subr.mxu0 0.0
    %108 = vmatpush1.msra.mxu0 0.0
    %109 = vmatprep.subr.mxu0 0.0
    %110 = vmatpush1.msra.mxu0 0.0
    %111 = vmatprep.subr.mxu0 0.0
    %112 = vmatpush1.msra.mxu0 0.0
    %113 = vmatprep.subr.mxu0 0.0
    %114 = vmatpush1.msra.mxu0 0.0
    %115 = vmatprep.subr.mxu0 0.0
    %116 = vmatpush1.msra.mxu0 0.0
    %117 = vmatprep.subr.mxu0 0.0
    %118 = vmatpush1.msra.mxu0 0.0
    %119 = vmatprep.subr.mxu0 0.0
    %120 = vmatpush1.msra.mxu0 0.0
    %121 = vmatprep.subr.mxu0 0.0
    %122 = vmatpush1.msra.mxu0 0.0
    %123 = vmatprep.subr.mxu0 0.0
    %124 = vmatpush1.msra.mxu0 0.0
    %125 = vmatprep.subr.mxu0 0.0
    %126 = vmatpush1.msra.mxu0 0.0
    %127 = vmatprep.subr.mxu0 0.0
    %128 = vmatpush1.msra.mxu0 0.0
    %129 = vmatprep.subr.mxu0 0.0
    %130 = vmatpush1.msra.mxu0 0.0
    %131 = vmatprep.subr.mxu0 0.0
    %132 = vmatpush1.msra.mxu0 0.0
    %133 = vmatprep.subr.mxu0 0.0
    %134 = vmatpush1.msra.mxu0 0.0
    %135 = vmatprep.subr.mxu0 0.0
    %136 = vmatpush1.msra.mxu0 0.0
    %137 = vmatprep.subr.mxu0 0.0
    %138 = vmatpush1.msra.mxu0 0.0
    %139 = vmatprep.subr.mxu0 0.0
    %140 = vmatpush1.msra.mxu0 0.0
    %141 = vmatprep.subr.mxu0 0.0
    %142 = vmatpush1.msra.mxu0 0.0
    %143 = vmatprep.subr.mxu0 0.0
    %144 = vmatpush1.msra.mxu0 0.0
    %145 = vmatprep.subr.mxu0 0.0
    %146 = vmatpush1.msra.mxu0 0.0
    %147 = vmatprep.subr.mxu0 0.0
    %148 = vmatpush1.msra.mxu0 0.0
    %149 = vmatprep.subr.mxu0 0.0
    %150 = vmatpush1.msra.mxu0 0.0
    %151 = vmatprep.subr.mxu0 0.0
    %152 = vmatpush1.msra.mxu0 0.0
    %153 = vmatprep.subr.mxu0 0.0
    %154 = vmatpush1.msra.mxu0 0.0
    %155 = vmatprep.mubr.f32.mxu0 0.0
    %156 = vmatmul.mubr.f32.gmra.mrb[0].mxu0 %v80
    %v157 = vpop.f32.mrb[0].mxu0
    %v158 = vadd.f32 %v76, %v157
    %v159 = vpop.f32.mrb[0].mxu0
    %160 = vmatprep.mubr.f32.mxu0 0.0
    %161 = vmatmul.mubr.f32.gmra.mrb[0].mxu0 %v83
    %v162 = vpop.f32.mrb[0].mxu0
    %v163 = vadd.f32 %v76, %v162
    %v164 = vpop.f32.mrb[0].mxu0
    %165 = vmatprep.mubr.f32.mxu0 0.0
    %166 = vmatmul.mubr.f32.gmra.mrb[0].mxu0 %v86
    %v167 = vpop.f32.mrb[0].mxu0
    %v168 = vadd.f32 %v76, %v167
    %v169 = vpop.f32.mrb[0].mxu0
    %170 = vmatprep.mubr.f32.mxu0 0.0
    %171 = vmatmul.mubr.f32.gmra.mrb[0].mxu0 %v89
    %v172 = vpop.f32.mrb[0].mxu0
    %v173 = vadd.f32 %v76, %v172
    %v174 = vpop.f32.mrb[0].mxu0
    %175 = vdwg.mxu0
    %v176 = vld [vmem:[#allocation7] sm:$0xff]
    %v177 = vld [vmem:[#allocation7 + $0x8] sm:$0xff]
    %v178 = vld [vmem:[#allocation7 + $0x10] sm:$0xff]
    %v179 = vld [vmem:[#allocation7 + $0x18] sm:$0xff]
    %v180 = vld [vmem:[#allocation5] sm:$0xff]
    %v182 = vsel %vm78, %v180, 0
    %184 = vmatprep.subr.mxu0 0.0
    %185 = vmatpush1.msra.mxu0 %v176
    %186 = vmatprep.subr.mxu0 0.0
    %187 = vmatpush1.msra.mxu0 %v177
    %188 = vmatprep.subr.mxu0 0.0
    %189 = vmatpush1.msra.mxu0 %v178
    %190 = vmatprep.subr.mxu0 0.0
    %191 = vmatpush1.msra.mxu0 %v179
    %192 = vmatprep.subr.mxu0 0.0
    %193 = vmatpush1.msra.mxu0 0.0
    %194 = vmatprep.subr.mxu0 0.0
    %195 = vmatpush1.msra.mxu0 0.0
    %196 = vmatprep.subr.mxu0 0.0
    %197 = vmatpush1.msra.mxu0 0.0
    %198 = vmatprep.subr.mxu0 0.0
    %199 = vmatpush1.msra.mxu0 0.0
    %200 = vmatprep.subr.mxu0 0.0
    %201 = vmatpush1.msra.mxu0 0.0
    %202 = vmatprep.subr.mxu0 0.0
    %203 = vmatpush1.msra.mxu0 0.0
    %204 = vmatprep.subr.mxu0 0.0
    %205 = vmatpush1.msra.mxu0 0.0
    %206 = vmatprep.subr.mxu0 0.0
    %207 = vmatpush1.msra.mxu0 0.0
    %208 = vmatprep.subr.mxu0 0.0
    %209 = vmatpush1.msra.mxu0 0.0
    %210 = vmatprep.subr.mxu0 0.0
    %211 = vmatpush1.msra.mxu0 0.0
    %212 = vmatprep.subr.mxu0 0.0
    %213 = vmatpush1.msra.mxu0 0.0
    %214 = vmatprep.subr.mxu0 0.0
    %215 = vmatpush1.msra.mxu0 0.0
    %216 = vmatprep.subr.mxu0 0.0
    %217 = vmatpush1.msra.mxu0 0.0
    %218 = vmatprep.subr.mxu0 0.0
    %219 = vmatpush1.msra.mxu0 0.0
    %220 = vmatprep.subr.mxu0 0.0
    %221 = vmatpush1.msra.mxu0 0.0
    %222 = vmatprep.subr.mxu0 0.0
    %223 = vmatpush1.msra.mxu0 0.0
    %224 = vmatprep.subr.mxu0 0.0
    %225 = vmatpush1.msra.mxu0 0.0
    %226 = vmatprep.subr.mxu0 0.0
    %227 = vmatpush1.msra.mxu0 0.0
    %228 = vmatprep.subr.mxu0 0.0
    %229 = vmatpush1.msra.mxu0 0.0
    %230 = vmatprep.subr.mxu0 0.0
    %231 = vmatpush1.msra.mxu0 0.0
    %232 = vmatprep.subr.mxu0 0.0
    %233 = vmatpush1.msra.mxu0 0.0
    %234 = vmatprep.subr.mxu0 0.0
    %235 = vmatpush1.msra.mxu0 0.0
    %236 = vmatprep.subr.mxu0 0.0
    %237 = vmatpush1.msra.mxu0 0.0
    %238 = vmatprep.subr.mxu0 0.0
    %239 = vmatpush1.msra.mxu0 0.0
    %240 = vmatprep.subr.mxu0 0.0
    %241 = vmatpush1.msra.mxu0 0.0
    %242 = vmatprep.subr.mxu0 0.0
    %243 = vmatpush1.msra.mxu0 0.0
    %244 = vmatprep.subr.mxu0 0.0
    %245 = vmatpush1.msra.mxu0 0.0
    %246 = vmatprep.subr.mxu0 0.0
    %247 = vmatpush1.msra.mxu0 0.0
    %248 = vmatprep.mubr.f32.mxu0 0.0
    %249 = vmatmul.mubr.f32.gmra.mrb[0].mxu0 %v182
    %v250 = vpop.f32.mrb[0].mxu0
    %v251 = vadd.f32 0.0, %v250
    %v252 = vpop.f32.mrb[0].mxu0
    %253 = vdwg.mxu0
    %v254 = vadd.f32 %v158, %v251
    %v255 = vxor.u32 %v254, 2147483648
    %v256 = vmul.f32 %v255, 1.442695
    %v257 = vpow.pop %v256
    %v258 = vadd.f32 %v257, 1.0
    %v259 = vrcp.pop %v258
    %v260 = vmul.f32 1.0, %v259
    %261 = vrot.lane.b32.xlu0 %v76, 96
    %v262 = vpop.permute.xlu0 %261
    %v264 = vadd.f32 %v251, %v262
    %266 = vrot.lane.b32.xlu0 %v264, 64
    %v267 = vpop.permute.xlu0 %266
    %v269 = vmul.f32 %v260, %v267
    %271 = vrot.lane.b32.xlu0 %v269, 64
    %v272 = vpop.permute.xlu0 %271
    %v274 = vadd.f32 %v158, %v272
    %v275 = vtanh.pop %v274
    %v276 = vsub.f32 1.0, %v260
    %278 = vrot.lane.b32.xlu0 %v275, 96
    %v279 = vpop.permute.xlu0 %278
    %v281 = vmul.f32 %v276, %v279
    %282 = vrot.lane.b32.xlu0 %v180, 32
    %v283 = vpop.permute.xlu0 %282
    %v285 = vmul.f32 %v260, %v283
    %v286 = vadd.f32 %v281, %v285
    %288 = vrot.lane.b32.xlu0 %v286, 96
    %v289 = vpop.permute.xlu0 %288
    %291 = vst.msk [vmem:[#allocation8] sm:$0xff] %vm78, %v289
    %v292 = vsel %vm78, %v289, 0
    %294 = vmatprep.subr.mxu0 0.0
    %295 = vmatpush1.msra.mxu0 %v176
    %296 = vmatprep.subr.mxu0 0.0
    %297 = vmatpush1.msra.mxu0 %v177
    %298 = vmatprep.subr.mxu0 0.0
    %299 = vmatpush1.msra.mxu0 %v178
    %300 = vmatprep.subr.mxu0 0.0
    %301 = vmatpush1.msra.mxu0 %v179
    %302 = vmatprep.subr.mxu0 0.0
    %303 = vmatpush1.msra.mxu0 0.0
    %304 = vmatprep.subr.mxu0 0.0
    %305 = vmatpush1.msra.mxu0 0.0
    %306 = vmatprep.subr.mxu0 0.0
    %307 = vmatpush1.msra.mxu0 0.0
    %308 = vmatprep.subr.mxu0 0.0
    %309 = vmatpush1.msra.mxu0 0.0
    %310 = vmatprep.subr.mxu0 0.0
    %311 = vmatpush1.msra.mxu0 0.0
    %312 = vmatprep.subr.mxu0 0.0
    %313 = vmatpush1.msra.mxu0 0.0
    %314 = vmatprep.subr.mxu0 0.0
    %315 = vmatpush1.msra.mxu0 0.0
    %316 = vmatprep.subr.mxu0 0.0
    %317 = vmatpush1.msra.mxu0 0.0
    %318 = vmatprep.subr.mxu0 0.0
    %319 = vmatpush1.msra.mxu0 0.0
    %320 = vmatprep.subr.mxu0 0.0
    %321 = vmatpush1.msra.mxu0 0.0
    %322 = vmatprep.subr.mxu0 0.0
    %323 = vmatpush1.msra.mxu0 0.0
    %324 = vmatprep.subr.mxu0 0.0
    %325 = vmatpush1.msra.mxu0 0.0
    %326 = vmatprep.subr.mxu0 0.0
    %327 = vmatpush1.msra.mxu0 0.0
    %328 = vmatprep.subr.mxu0 0.0
    %329 = vmatpush1.msra.mxu0 0.0
    %330 = vmatprep.subr.mxu0 0.0
    %331 = vmatpush1.msra.mxu0 0.0
    %332 = vmatprep.subr.mxu0 0.0
    %333 = vmatpush1.msra.mxu0 0.0
    %334 = vmatprep.subr.mxu0 0.0
    %335 = vmatpush1.msra.mxu0 0.0
    %336 = vmatprep.subr.mxu0 0.0
    %337 = vmatpush1.msra.mxu0 0.0
    %338 = vmatprep.subr.mxu0 0.0
    %339 = vmatpush1.msra.mxu0 0.0
    %340 = vmatprep.subr.mxu0 0.0
    %341 = vmatpush1.msra.mxu0 0.0
    %342 = vmatprep.subr.mxu0 0.0
    %343 = vmatpush1.msra.mxu0 0.0
    %344 = vmatprep.subr.mxu0 0.0
    %345 = vmatpush1.msra.mxu0 0.0
    %346 = vmatprep.subr.mxu0 0.0
    %347 = vmatpush1.msra.mxu0 0.0
    %348 = vmatprep.subr.mxu0 0.0
    %349 = vmatpush1.msra.mxu0 0.0
    %350 = vmatprep.subr.mxu0 0.0
    %351 = vmatpush1.msra.mxu0 0.0
    %352 = vmatprep.subr.mxu0 0.0
    %353 = vmatpush1.msra.mxu0 0.0
    %354 = vmatprep.subr.mxu0 0.0
    %355 = vmatpush1.msra.mxu0 0.0
    %356 = vmatprep.subr.mxu0 0.0
    %357 = vmatpush1.msra.mxu0 0.0
    %358 = vmatprep.mubr.f32.mxu0 0.0
    %359 = vmatmul.mubr.f32.gmra.mrb[0].mxu0 %v292
    %v360 = vpop.f32.mrb[0].mxu0
    %v361 = vadd.f32 0.0, %v360
    %v362 = vpop.f32.mrb[0].mxu0
    %363 = vdwg.mxu0
    %v364 = vadd.f32 %v163, %v361
    %v365 = vxor.u32 %v364, 2147483648
    %v366 = vmul.f32 %v365, 1.442695
    %v367 = vpow.pop %v366
    %v368 = vadd.f32 %v367, 1.0
    %v369 = vrcp.pop %v368
    %v370 = vmul.f32 1.0, %v369
    %v371 = vadd.f32 %v361, %v262
    %373 = vrot.lane.b32.xlu0 %v371, 64
    %v374 = vpop.permute.xlu0 %373
    %v376 = vmul.f32 %v370, %v374
    %378 = vrot.lane.b32.xlu0 %v376, 64
    %v379 = vpop.permute.xlu0 %378
    %v381 = vadd.f32 %v163, %v379
    %v382 = vtanh.pop %v381
    %v383 = vsub.f32 1.0, %v370
    %385 = vrot.lane.b32.xlu0 %v382, 96
    %v386 = vpop.permute.xlu0 %385
    %v388 = vmul.f32 %v383, %v386
    %v389 = vmul.f32 %v370, %v286
    %v390 = vadd.f32 %v388, %v389
    %392 = vrot.lane.b32.xlu0 %v390, 96
    %v393 = vpop.permute.xlu0 %392
    %s395 = scalar_lea.vmem [#allocation8], 8
    %396 = vst.msk [vmem:[%s395] sm:$0xff] %vm78, %v393
    %v397 = vsel %vm78, %v393, 0
    %399 = vmatprep.subr.mxu0 0.0
    %400 = vmatpush1.msra.mxu0 %v176
    %401 = vmatprep.subr.mxu0 0.0
    %402 = vmatpush1.msra.mxu0 %v177
    %403 = vmatprep.subr.mxu0 0.0
    %404 = vmatpush1.msra.mxu0 %v178
    %405 = vmatprep.subr.mxu0 0.0
    %406 = vmatpush1.msra.mxu0 %v179
    %407 = vmatprep.subr.mxu0 0.0
    %408 = vmatpush1.msra.mxu0 0.0
    %409 = vmatprep.subr.mxu0 0.0
    %410 = vmatpush1.msra.mxu0 0.0
    %411 = vmatprep.subr.mxu0 0.0
    %412 = vmatpush1.msra.mxu0 0.0
    %413 = vmatprep.subr.mxu0 0.0
    %414 = vmatpush1.msra.mxu0 0.0
    %415 = vmatprep.subr.mxu0 0.0
    %416 = vmatpush1.msra.mxu0 0.0
    %417 = vmatprep.subr.mxu0 0.0
    %418 = vmatpush1.msra.mxu0 0.0
    %419 = vmatprep.subr.mxu0 0.0
    %420 = vmatpush1.msra.mxu0 0.0
    %421 = vmatprep.subr.mxu0 0.0
    %422 = vmatpush1.msra.mxu0 0.0
    %423 = vmatprep.subr.mxu0 0.0
    %424 = vmatpush1.msra.mxu0 0.0
    %425 = vmatprep.subr.mxu0 0.0
    %426 = vmatpush1.msra.mxu0 0.0
    %427 = vmatprep.subr.mxu0 0.0
    %428 = vmatpush1.msra.mxu0 0.0
    %429 = vmatprep.subr.mxu0 0.0
    %430 = vmatpush1.msra.mxu0 0.0
    %431 = vmatprep.subr.mxu0 0.0
    %432 = vmatpush1.msra.mxu0 0.0
    %433 = vmatprep.subr.mxu0 0.0
    %434 = vmatpush1.msra.mxu0 0.0
    %435 = vmatprep.subr.mxu0 0.0
    %436 = vmatpush1.msra.mxu0 0.0
    %437 = vmatprep.subr.mxu0 0.0
    %438 = vmatpush1.msra.mxu0 0.0
    %439 = vmatprep.subr.mxu0 0.0
    %440 = vmatpush1.msra.mxu0 0.0
    %441 = vmatprep.subr.mxu0 0.0
    %442 = vmatpush1.msra.mxu0 0.0
    %443 = vmatprep.subr.mxu0 0.0
    %444 = vmatpush1.msra.mxu0 0.0
    %445 = vmatprep.subr.mxu0 0.0
    %446 = vmatpush1.msra.mxu0 0.0
    %447 = vmatprep.subr.mxu0 0.0
    %448 = vmatpush1.msra.mxu0 0.0
    %449 = vmatprep.subr.mxu0 0.0
    %450 = vmatpush1.msra.mxu0 0.0
    %451 = vmatprep.subr.mxu0 0.0
    %452 = vmatpush1.msra.mxu0 0.0
    %453 = vmatprep.subr.mxu0 0.0
    %454 = vmatpush1.msra.mxu0 0.0
    %455 = vmatprep.subr.mxu0 0.0
    %456 = vmatpush1.msra.mxu0 0.0
    %457 = vmatprep.subr.mxu0 0.0
    %458 = vmatpush1.msra.mxu0 0.0
    %459 = vmatprep.subr.mxu0 0.0
    %460 = vmatpush1.msra.mxu0 0.0
    %461 = vmatprep.subr.mxu0 0.0
    %462 = vmatpush1.msra.mxu0 0.0
    %463 = vmatprep.mubr.f32.mxu0 0.0
    %464 = vmatmul.mubr.f32.gmra.mrb[0].mxu0 %v397
    %v465 = vpop.f32.mrb[0].mxu0
    %v466 = vadd.f32 0.0, %v465
    %v467 = vpop.f32.mrb[0].mxu0
    %468 = vdwg.mxu0
    %v469 = vadd.f32 %v168, %v466
    %v470 = vxor.u32 %v469, 2147483648
    %v471 = vmul.f32 %v470, 1.442695
    %v472 = vpow.pop %v471
    %v473 = vadd.f32 %v472, 1.0
    %v474 = vrcp.pop %v473
    %v475 = vmul.f32 1.0, %v474
    %v476 = vadd.f32 %v466, %v262
    %478 = vrot.lane.b32.xlu0 %v476, 64
    %v479 = vpop.permute.xlu0 %478
    %v481 = vmul.f32 %v475, %v479
    %483 = vrot.lane.b32.xlu0 %v481, 64
    %v484 = vpop.permute.xlu0 %483
    %v486 = vadd.f32 %v168, %v484
    %v487 = vtanh.pop %v486
    %v488 = vsub.f32 1.0, %v475
    %490 = vrot.lane.b32.xlu0 %v487, 96
    %v491 = vpop.permute.xlu0 %490
    %v493 = vmul.f32 %v488, %v491
    %v494 = vmul.f32 %v475, %v390
    %v495 = vadd.f32 %v493, %v494
    %497 = vrot.lane.b32.xlu0 %v495, 96
    %v498 = vpop.permute.xlu0 %497
    %s500 = scalar_lea.vmem [#allocation8], 16
    %501 = vst.msk [vmem:[%s500] sm:$0xff] %vm78, %v498
    %v502 = vsel %vm78, %v498, 0
    %504 = vmatprep.subr.mxu0 0.0
    %505 = vmatpush1.msra.mxu0 %v176
    %506 = vmatprep.subr.mxu0 0.0
    %507 = vmatpush1.msra.mxu0 %v177
    %508 = vmatprep.subr.mxu0 0.0
    %509 = vmatpush1.msra.mxu0 %v178
    %510 = vmatprep.subr.mxu0 0.0
    %511 = vmatpush1.msra.mxu0 %v179
    %512 = vmatprep.subr.mxu0 0.0
    %513 = vmatpush1.msra.mxu0 0.0
    %514 = vmatprep.subr.mxu0 0.0
    %515 = vmatpush1.msra.mxu0 0.0
    %516 = vmatprep.subr.mxu0 0.0
    %517 = vmatpush1.msra.mxu0 0.0
    %518 = vmatprep.subr.mxu0 0.0
    %519 = vmatpush1.msra.mxu0 0.0
    %520 = vmatprep.subr.mxu0 0.0
    %521 = vmatpush1.msra.mxu0 0.0
    %522 = vmatprep.subr.mxu0 0.0
    %523 = vmatpush1.msra.mxu0 0.0
    %524 = vmatprep.subr.mxu0 0.0
    %525 = vmatpush1.msra.mxu0 0.0
    %526 = vmatprep.subr.mxu0 0.0
    %527 = vmatpush1.msra.mxu0 0.0
    %528 = vmatprep.subr.mxu0 0.0
    %529 = vmatpush1.msra.mxu0 0.0
    %530 = vmatprep.subr.mxu0 0.0
    %531 = vmatpush1.msra.mxu0 0.0
    %532 = vmatprep.subr.mxu0 0.0
    %533 = vmatpush1.msra.mxu0 0.0
    %534 = vmatprep.subr.mxu0 0.0
    %535 = vmatpush1.msra.mxu0 0.0
    %536 = vmatprep.subr.mxu0 0.0
    %537 = vmatpush1.msra.mxu0 0.0
    %538 = vmatprep.subr.mxu0 0.0
    %539 = vmatpush1.msra.mxu0 0.0
    %540 = vmatprep.subr.mxu0 0.0
    %541 = vmatpush1.msra.mxu0 0.0
    %542 = vmatprep.subr.mxu0 0.0
    %543 = vmatpush1.msra.mxu0 0.0
    %544 = vmatprep.subr.mxu0 0.0
    %545 = vmatpush1.msra.mxu0 0.0
    %546 = vmatprep.subr.mxu0 0.0
    %547 = vmatpush1.msra.mxu0 0.0
    %548 = vmatprep.subr.mxu0 0.0
    %549 = vmatpush1.msra.mxu0 0.0
    %550 = vmatprep.subr.mxu0 0.0
    %551 = vmatpush1.msra.mxu0 0.0
    %552 = vmatprep.subr.mxu0 0.0
    %553 = vmatpush1.msra.mxu0 0.0
    %554 = vmatprep.subr.mxu0 0.0
    %555 = vmatpush1.msra.mxu0 0.0
    %556 = vmatprep.subr.mxu0 0.0
    %557 = vmatpush1.msra.mxu0 0.0
    %558 = vmatprep.subr.mxu0 0.0
    %559 = vmatpush1.msra.mxu0 0.0
    %560 = vmatprep.subr.mxu0 0.0
    %561 = vmatpush1.msra.mxu0 0.0
    %562 = vmatprep.subr.mxu0 0.0
    %563 = vmatpush1.msra.mxu0 0.0
    %564 = vmatprep.subr.mxu0 0.0
    %565 = vmatpush1.msra.mxu0 0.0
    %566 = vmatprep.subr.mxu0 0.0
    %567 = vmatpush1.msra.mxu0 0.0
    %568 = vmatprep.mubr.f32.mxu0 0.0
    %569 = vmatmul.mubr.f32.gmra.mrb[0].mxu0 %v502
    %v570 = vpop.f32.mrb[0].mxu0
    %v571 = vadd.f32 0.0, %v570
    %v572 = vpop.f32.mrb[0].mxu0
    %573 = vdwg.mxu0
    %v574 = vadd.f32 %v173, %v571
    %v575 = vxor.u32 %v574, 2147483648
    %v576 = vmul.f32 %v575, 1.442695
    %v577 = vpow.pop %v576
    %v578 = vadd.f32 %v577, 1.0
    %v579 = vrcp.pop %v578
    %v580 = vmul.f32 1.0, %v579
    %v581 = vadd.f32 %v571, %v262
    %583 = vrot.lane.b32.xlu0 %v581, 64
    %v584 = vpop.permute.xlu0 %583
    %v586 = vmul.f32 %v580, %v584
    %588 = vrot.lane.b32.xlu0 %v586, 64
    %v589 = vpop.permute.xlu0 %588
    %v591 = vadd.f32 %v173, %v589
    %v592 = vtanh.pop %v591
    %v593 = vsub.f32 1.0, %v580
    %595 = vrot.lane.b32.xlu0 %v592, 96
    %v596 = vpop.permute.xlu0 %595
    %v598 = vmul.f32 %v593, %v596
    %v599 = vmul.f32 %v580, %v495
    %v600 = vadd.f32 %v598, %v599
    %602 = vrot.lane.b32.xlu0 %v600, 96
    %v603 = vpop.permute.xlu0 %602
    %s605 = scalar_lea.vmem [#allocation8], 24
    %606 = vst.msk [vmem:[%s605] sm:$0xff] %vm78, %v603
    %607 = vst.msk [vmem:[#allocation9] sm:$0xff] %vm78, %v603
    // Predicated region
    $region34: #{path_decoder_forward.1} parent=1 // pred_check
      _
    $region35: #{path_decoder_forward.1} parent=1 // pred_check_branch
      %609 = sbr.rel (0) target = $region37
    $region36: #{path_decoder_forward.1} parent=1 // pred_region
      %s611 = ssub.s32 512, 512
      %612 = vsyncadd [#allocation4], %s611
      %s613 = sshll.u32 [#allocation8], 4
      %s614 = int_to_ptr.vmem [resolvable:$true] %s613
      %619 = dma.vmem_to_hbm [thread:$0]  %s614, 512, %s5, [#allocation4], 128, 128, 8
    $region37: #{path_decoder_forward.1} parent=1 // pred_fallthru
      _
    // Predicated region
    $region38: #{path_decoder_forward.1} parent=1 // pred_check
      _
    $region39: #{path_decoder_forward.1} parent=1 // pred_check_branch
      %621 = sbr.rel (0) target = $region41
    $region40: #{path_decoder_forward.1} parent=1 // pred_region
      %s623 = ssub.s32 128, 128
      %624 = vsyncadd [#allocation10], %s623
      %s626 = sshll.u32 [#allocation9], 4
      %s627 = int_to_ptr.vmem [resolvable:$true] %s626
      %629 = dma.vmem_to_hbm [thread:$0]  %s627, 128, %s6, [#allocation10]
    $region41: #{path_decoder_forward.1} parent=1 // pred_fallthru
      _
    // Predicated region
    $region42: #{path_decoder_forward.1} parent=1 // pred_check
      _
    $region43: #{path_decoder_forward.1} parent=1 // pred_check_branch
      %631 = sbr.rel (0) target = $region45
    $region44: #{path_decoder_forward.1} parent=1 // pred_region
      %632 = dma.done [#allocation4], 512
    $region45: #{path_decoder_forward.1} parent=1 // pred_fallthru
      _
    // Predicated region
    $region46: #{path_decoder_forward.1} parent=1 // pred_check
      _
    $region47: #{path_decoder_forward.1} parent=1 // pred_check_branch
      %634 = sbr.rel (0) target = $region49
    $region48: #{path_decoder_forward.1} parent=1 // pred_region
      %635 = dma.done [#allocation10], 128
    $region49: #{path_decoder_forward.1} parent=1 // pred_fallthru
      _
    %636 = vsyncpa [#allocation3], 1
    %637 = vsyncpa [#allocation6], 1
    %638 = vsyncpa [#allocation4], 1
    %639 = vsyncpa [#allocation10], 1

</llo_original>
